<compile_context>
chip_gen: v6e
topology: v6e:2x2x1
jax: 0.10.0
libtpu: 0.0.40
codegen_flags: <defaults>
</compile_context>

<pallas_src>
import math

import jax
import jax.numpy as jnp
from jax.experimental import pallas as pl
from jax.experimental.pallas import tpu as pltpu


def _build_pe_table(d_model: int, max_seq_length: int = 100) -> jnp.ndarray:
    """Sinusoidal positional-encoding table (max_seq_length, d_model); handles odd d_model."""
    position = jnp.arange(0, max_seq_length, dtype=jnp.float32)[:, None]          # (L, 1)
    div_term = jnp.exp(
        jnp.arange(0, d_model, 2, dtype=jnp.float32) * (-math.log(10000.0) / d_model)
    )                                                                              # (ceil(D/2),)
    pe = jnp.zeros((max_seq_length, d_model), dtype=jnp.float32)
    pe = pe.at[:, 0::2].set(jnp.sin(position * div_term))
    # cos fills only floor(D/2) columns -> works for odd d_model too
    pe = pe.at[:, 1::2].set(jnp.cos(position * div_term)[:, : d_model // 2])
    return pe


def _pe_add_kernel(x_ref, pe_ref, o_ref):
    # x_ref, pe_ref, o_ref are all (TILE_S, D): plain lane-aligned VPU add, no broadcast.
    o_ref[...] = (x_ref[...] + pe_ref[...]).astype(o_ref.dtype)


def _choose_tile_s(S: int, D: int, itemsize: int, sublane: int,
                   target_block_bytes: int = 2 * 1024 * 1024) -> int:
    """Largest multiple of `sublane` dividing S with tile_s*D*itemsize <= ~2 MiB."""
    max_rows = max(sublane, target_block_bytes // max(1, D * itemsize))
    tile = 0
    for cand in range(sublane, S + 1, sublane):
        if S % cand == 0 and cand <= max_rows:
            tile = cand
    return tile


def positional_encoding_forward(x: jnp.ndarray, pe_table: jnp.ndarray,
                                tile_s: int | None = None) -> jnp.ndarray:
    """x: (B, S, D); pe_table: (max_seq_length, D). Returns x + pe[:S]."""
    B, S, D = x.shape
    assert S <= pe_table.shape[0], "sequence length exceeds max_seq_length"

    # Cast pe once (avoids per-element f32 promotion + downcast inside the kernel).
    pe = pe_table if pe_table.dtype == x.dtype else pe_table.astype(x.dtype)

    itemsize = jnp.dtype(x.dtype).itemsize
    sublane = 16 if itemsize == 2 else 8

    # Fallback: unaligned (or genuinely tiny) shapes are better served by a fused XLA
    # broadcast-add than by masked partial stores in a Pallas kernel.
    if D % 128 != 0 or S % sublane != 0:
        return x + pe[None, :S, :]

    if tile_s is None:
        tile_s = _choose_tile_s(S, D, itemsize, sublane)
    assert tile_s > 0 and S % tile_s == 0 and tile_s % sublane == 0

    n_s_tiles = S // tile_s

    cost = pl.CostEstimate(
        flops=B * S * D,
        transcendentals=0,
        bytes_accessed=2 * B * S * D * itemsize + S * D * pe.dtype.itemsize,
    )

    return pl.pallas_call(
        _pe_add_kernel,
        out_shape=jax.ShapeDtypeStruct((B, S, D), x.dtype),
        grid_spec=pltpu.PrefetchScalarGridSpec(
            num_scalar_prefetch=0,
            # Batch is the inner axis -> pe block index (s, 0) is constant across it,
            # so the pe tile stays VMEM-resident and is not re-DMA'd per batch step.
            grid=(n_s_tiles, B),
            in_specs=[
                pl.BlockSpec((pl.Squeezed(), tile_s, D), lambda s, b: (b, s, 0)),  # x
                pl.BlockSpec((tile_s, D), lambda s, b: (s, 0)),                    # pe (full table, windowed)
            ],
            out_specs=pl.BlockSpec((pl.Squeezed(), tile_s, D), lambda s, b: (b, s, 0)),
        ),
        compiler_params=pltpu.CompilerParams(
            dimension_semantics=("parallel", "parallel"),
        ),
        cost_estimate=cost,
    )(x, pe)


if __name__ == "__main__":
    # Small shapes consistent with the module's forward (batch, seq, d_model),
    # chosen lane-dense (d_model % 128 == 0) so the Pallas path is exercised.
    B, S, D = 2, 16, 128
    MAX_SEQ = 100

    key = jax.random.PRNGKey(0)
    x = jax.random.normal(key, (B, S, D), dtype=jnp.float32)

    pe_table = _build_pe_table(D, MAX_SEQ)
    ref = x + pe_table[None, :S, :]

    # Default tiling (single S block here since S is small).
    out = jax.block_until_ready(positional_encoding_forward(x, pe_table))
    assert out.shape == (B, S, D)
    assert jnp.allclose(out, ref, atol=1e-6), "mismatch vs reference (default tile)"

    # Force multi-tile S to exercise the tiled path (TILE_S=8 -> grid=(2, 2)).
    out_tiled = jax.block_until_ready(positional_encoding_forward(x, pe_table, tile_s=8))
    assert jnp.allclose(out_tiled, ref, atol=1e-6), "mismatch vs reference (tiled)"

    # Unaligned-D fallback path (plain fused XLA add) still matches semantics.
    x_small = jax.random.normal(key, (B, 8, 32), dtype=jnp.float32)
    pe_small = _build_pe_table(32, MAX_SEQ)
    out_small = jax.block_until_ready(positional_encoding_forward(x_small, pe_small))
    assert jnp.allclose(out_small, x_small + pe_small[None, :8, :], atol=1e-6)

    print("KERNEL_OK")
</pallas_src>

<mosaic_0001>
module attributes {stable_mosaic.version = 11 : i64} {
  func.func @_pe_add_kernel(%arg0: i32, %arg1: i32, %arg2: memref<1x16x128xf32, #tpu.memory_space<vmem>>, %arg3: memref<16x128xf32, #tpu.memory_space<vmem>>, %arg4: memref<1x16x128xf32, #tpu.memory_space<vmem>>) attributes {dimension_semantics = [#tpu.dimension_semantics<parallel>, #tpu.dimension_semantics<parallel>], iteration_bounds = array<i64: 1, 2>, scalar_prefetch = 0 : i64, scratch_operands = 0 : i64, tpu.core_type = #tpu.core_type<tc>, window_params = [{transform_indices = @transform_0, window_bounds = array<i64: 1, 16, 128>}, {transform_indices = @transform_1, window_bounds = array<i64: 16, 128>}, {transform_indices = @transform_2, window_bounds = array<i64: 1, 16, 128>}]} {
    %c0 = arith.constant 0 : index
    %c0_0 = arith.constant 0 : index
    %c0_1 = arith.constant 0 : index
    %0 = vector.load %arg2[%c0, %c0_0, %c0_1] : memref<1x16x128xf32, #tpu.memory_space<vmem>>, vector<1x16x128xf32>
    %1 = vector.shape_cast %0 : vector<1x16x128xf32> to vector<16x128xf32>
    %c0_2 = arith.constant 0 : index
    %c0_3 = arith.constant 0 : index
    %2 = vector.load %arg3[%c0_2, %c0_3] : memref<16x128xf32, #tpu.memory_space<vmem>>, vector<16x128xf32>
    %3 = arith.addf %1, %2 : vector<16x128xf32>
    %c0_4 = arith.constant 0 : index
    %c0_5 = arith.constant 0 : index
    %c0_6 = arith.constant 0 : index
    %4 = vector.load %arg4[%c0_4, %c0_5, %c0_6] : memref<1x16x128xf32, #tpu.memory_space<vmem>>, vector<1x16x128xf32>
    %5 = vector.shape_cast %4 : vector<1x16x128xf32> to vector<16x128xf32>
    %6 = vector.shape_cast %3 : vector<16x128xf32> to vector<1x16x128xf32>
    tpu.vector_store %arg4[%c0_4, %c0_5, %c0_6], %6 {strides = array<i32>} : memref<1x16x128xf32, #tpu.memory_space<vmem>>, vector<1x16x128xf32>,
    return
  }
  func.func @transform_0(%arg0: i32, %arg1: i32) -> (i32, i32, i32) {
    %c0_i32 = arith.constant 0 : i32
    %c0_i32_0 = arith.constant 0 : i32
    return %arg1, %arg0, %c0_i32 : i32, i32, i32
  }
  func.func @transform_1(%arg0: i32, %arg1: i32) -> (i32, i32) {
    %c0_i32 = arith.constant 0 : i32
    %c0_i32_0 = arith.constant 0 : i32
    return %arg0, %c0_i32 : i32, i32
  }
  func.func @transform_2(%arg0: i32, %arg1: i32) -> (i32, i32, i32) {
    %c0_i32 = arith.constant 0 : i32
    %c0_i32_0 = arith.constant 0 : i32
    return %arg1, %arg0, %c0_i32 : i32, i32, i32
  }
}

</mosaic_0001>

<llo_original>
// kernel: tpu_custom_call.1
$region0: #{tpu_custom_call.1}
  #allocation0 [shape = 'u32[]', space=smem, size = 0x4, offset = 0x4, fixed_abs, tag = 'smem constant byte address 0x4 - core index']
  #allocation1 [shape = 'u32[144,128]{1,0:T(1,128)}', space=vmem, size = 0x12000, scoped, tag = 'internal scratch']
  %s0 = inlined_call_operand.hbm [shape: f32[2,16,128], index: 0, kind: input, shape index: {}]
  %s1 = inlined_call_operand.hbm [shape: f32[100,128], index: 1, kind: input, shape index: {}]
  %s2 = inlined_call_operand.hbm [shape: f32[2,16,128], index: 2, kind: output, shape index: {}]
  %s3 = sld [smem:[#allocation0]]
  $region49: #{tpu_custom_call.1} parent=0
    _
  %s5 = ssub.s32 1, %s3
  %s6 = scalar_select 0, %s5, %s3
  $region1: #{tpu_custom_call.1} parent=0
    #allocation2 [shape = 'u8[16384]{0}', space=vmem, size = 0x4000, scoped, tag = 'input window, operand 0']
    #allocation3 [shape = 's32[2]{0}', space=sflag, size = 0x8, scoped, tag = 'scoped memory for tpu_custom_call.1']
    #allocation4 [shape = 's32[2]{0}', space=sflag, size = 0x8, scoped, tag = 'scoped memory for tpu_custom_call.1']
    #allocation5 [shape = 'u8[8192]{0}', space=vmem, size = 0x2000, scoped, tag = 'input window, operand 1, single buffered']
    #allocation6 [shape = 's32[1]{0}', space=sflag, size = 0x4, scoped, tag = 'scoped memory for tpu_custom_call.1']
    #allocation7 [shape = 'u8[16384]{0}', space=vmem, size = 0x4000, scoped, tag = 'output window, operand 0']
    %7 = vsyncpa [#allocation3], 0
    %s8 = scalar_lea.sflag [#allocation3], 1
    %9 = vsyncpa %s8, 0
    %10 = vsyncpa [#allocation6], 0
    %11 = vsyncpa [#allocation4], 0
    %s12 = scalar_lea.sflag [#allocation4], 1
    %13 = vsyncpa %s12, 0
    loop: start=0, step=1, limit=4
    $region2: #{tpu_custom_call.1} parent=1 // loop_pre_header
      _
    $region3: #{tpu_custom_call.1} parent=1 // loop_header
      %s15 = sphi 0, %s19
      %p16 = scmp.ge.s32.totalorder %s15, 4
      %s22 = sphi 0, %s34
      %s23 = sphi 0, %s30
      %s24 = sphi 0, %s22
      %s25 = sphi 0, %s23
      %s26 = sphi 0, %s24
      %s27 = sphi 0, %s25
      %s39 = sphi 0, %s41
      %s42 = sphi 0, %s39
      %s43 = sphi 0, %s42
      %s59 = sphi 0, %s43
      %s65 = sphi 0, %s67
      %s68 = sphi 0, %s65
      %s69 = sphi 0, %s68
      %s85 = sphi 0, %s69
      %s93 = sphi 0, %s95
      %s96 = sphi 0, %s93
      %s97 = sphi 0, %s96
      %s113 = sphi 0, %s97
    $region4: #{tpu_custom_call.1} parent=1 // loop_header_branch
      %18 = sbr.rel (%p16) target = $region8
    $region5: #{tpu_custom_call.1} parent=1 // loop_body
      %s20 = ssub.s32 %s15, 1
      %s21 = ssub.s32 %s15, 2
      %s28 = sadd.s32 1, %s23
      %p29 = scmp.ge.s32.totalorder %s28, 2
      %s30 = scalar_select %p29, 0, %s28
      %s31 = sadd.s32 1, %s22
      %s32 = scalar_select %p29, %s31, %s22
      %p33 = scmp.ge.s32.totalorder %s32, 1
      %s34 = scalar_select %p33, 0, %s32
      %s35 = ssub.s32 %s23, %s30
      %s36 = ssub.s32 %s22, %s34
      %s37 = sor.u32 %s35, %s36
      %p38 = scmp.eq.s32.totalorder %s37, 0
      %s40 = sadd.s32 %s39, 1
      %s41 = scalar_select %p38, %s39, %s40
      %p44 = pneg %p38
      %p45 = scmp.eq.s32.totalorder %s15, 1
      %p46 = por %p44, %p45
      %p47 = scmp.ne.s32.totalorder %s39, %s42
      %p48 = scmp.eq.s32.totalorder %s15, 0
      %p49 = por %p47, %p48
      %p50 = scmp.ne.s32.totalorder %s39, %s42
      %p51 = scmp.eq.s32.totalorder %s20, 1
      %p52 = por %p50, %p51
      %p53 = scmp.ne.s32.totalorder %s42, %s43
      %p54 = scmp.eq.s32.totalorder %s20, 0
      %p55 = por %p53, %p54
      %p56 = scmp.ne.s32.totalorder %s42, %s43
      %p57 = scmp.eq.s32.totalorder %s21, 1
      %p58 = por %p56, %p57
      %p60 = scmp.ne.s32.totalorder %s43, %s59
      %p61 = scmp.eq.s32.totalorder %s21, 0
      %p62 = por %p60, %p61
      %s63 = ssub.s32 %s22, %s34
      %p64 = scmp.eq.s32.totalorder %s63, 0
      %s66 = sadd.s32 %s65, 1
      %s67 = scalar_select %p64, %s65, %s66
      %p70 = pneg %p64
      %p71 = scmp.eq.s32.totalorder %s15, 1
      %p72 = por %p70, %p71
      %p73 = scmp.ne.s32.totalorder %s65, %s68
      %p74 = scmp.eq.s32.totalorder %s15, 0
      %p75 = por %p73, %p74
      %p76 = scmp.ne.s32.totalorder %s65, %s68
      %p77 = scmp.eq.s32.totalorder %s20, 1
      %p78 = por %p76, %p77
      %p79 = scmp.ne.s32.totalorder %s68, %s69
      %p80 = scmp.eq.s32.totalorder %s20, 0
      %p81 = por %p79, %p80
      %p82 = scmp.ne.s32.totalorder %s68, %s69
      %p83 = scmp.eq.s32.totalorder %s21, 1
      %p84 = por %p82, %p83
      %p86 = scmp.ne.s32.totalorder %s69, %s85
      %p87 = scmp.eq.s32.totalorder %s21, 0
      %p88 = por %p86, %p87
      %s89 = ssub.s32 %s23, %s30
      %s90 = ssub.s32 %s22, %s34
      %s91 = sor.u32 %s89, %s90
      %p92 = scmp.eq.s32.totalorder %s91, 0
      %s94 = sadd.s32 %s93, 1
      %s95 = scalar_select %p92, %s93, %s94
      %p98 = pneg %p92
      %p99 = scmp.eq.s32.totalorder %s15, 1
      %p100 = por %p98, %p99
      %p101 = scmp.ne.s32.totalorder %s93, %s96
      %p102 = scmp.eq.s32.totalorder %s15, 0
      %p103 = por %p101, %p102
      %p104 = scmp.ne.s32.totalorder %s93, %s96
      %p105 = scmp.eq.s32.totalorder %s20, 1
      %p106 = por %p104, %p105
      %p107 = scmp.ne.s32.totalorder %s96, %s97
      %p108 = scmp.eq.s32.totalorder %s20, 0
      %p109 = por %p107, %p108
      %p110 = scmp.ne.s32.totalorder %s96, %s97
      %p111 = scmp.eq.s32.totalorder %s21, 1
      %p112 = por %p110, %p111
      %p114 = scmp.ne.s32.totalorder %s97, %s113
      %p115 = scmp.eq.s32.totalorder %s21, 0
      %p116 = por %p114, %p115
      %p117 = scmp.le.s32.totalorder 1, %s15
      %p118 = scmp.lt.s32.totalorder %s15, 3
      %p119 = pnand %p117, %p118
      %p120 = pneg %p119
      // Predicated region
      $region9: #{tpu_custom_call.1} parent=5 // pred_check
        _
      $region10: #{tpu_custom_call.1} parent=5 // pred_check_branch
        %122 = sbr.rel (%p119) target = $region12
      $region11: #{tpu_custom_call.1} parent=5 // pred_region
        %s123 = ssub.s32 %s15, 1
        // Predicated region
        $region13: #{tpu_custom_call.1} parent=11 // pred_check
          %p124 = pneg %p81
        $region14: #{tpu_custom_call.1} parent=11 // pred_check_branch
          %126 = sbr.rel (%p124) target = $region16
        $region15: #{tpu_custom_call.1} parent=11 // pred_region
          %s127 = smul.u32 2, %s24
          %s128 = ssub.s32 13, %s127
          %p129 = scmp.lt.s32.totalorder %s128, 2
          %s130 = scalar_select %p129, %s128, 2
          %s131 = smul.u32 128, %s130
          %s133 = ssub.s32 256, %s131
          %134 = vsyncadd [#allocation6], %s133
          %p135 = scmp.ne.s32.totalorder 0, %s131
          %s136 = smul.addr %s127, 128
          %s137 = scalar_lea.hbm %s1, %s136
          %s138 = smul.u32 8, %s130
          %s139 = sshll.u32 [#allocation5], 4
          %s140 = int_to_ptr.vmem [resolvable:$true] %s139
          %s141 = sshll.u32 %s138, 4
          %145 = dma.hbm_to_vmem [thread:$0]  (%p135), %s137, %s141, %s140, [#allocation6], 128, 128, 8
        $region16: #{tpu_custom_call.1} parent=11 // pred_fallthru
          _
      $region12: #{tpu_custom_call.1} parent=5 // pred_fallthru
        _
      %p146 = scmp.lt.s32.totalorder %s15, 2
      // Predicated region
      $region17: #{tpu_custom_call.1} parent=5 // pred_check
        %p147 = pneg %p146
      $region18: #{tpu_custom_call.1} parent=5 // pred_check_branch
        %149 = sbr.rel (%p147) target = $region20
      $region19: #{tpu_custom_call.1} parent=5 // pred_region
        // Predicated region
        $region21: #{tpu_custom_call.1} parent=19 // pred_check
          %p150 = pneg %p49
        $region22: #{tpu_custom_call.1} parent=19 // pred_check_branch
          %152 = sbr.rel (%p150) target = $region24
        $region23: #{tpu_custom_call.1} parent=19 // pred_region
          %s153 = sand.u32 %s39, 1
          %s154 = scalar_lea.sflag [#allocation3], %s153
          %s155 = sand.u32 %s39, 1
          %s156 = smul.addr %s155, 16
          %s157 = scalar_lea.vmem [#allocation2], %s156
          %s158 = smul.u32 2, %s22
          %s160 = ssub.s32 256, 256
          %161 = vsyncadd %s154, %s160
          %s162 = smul.addr %s23, 2
          %s163 = sadd.s32 %s158, %s162
          %s164 = smul.addr %s163, 128
          %s165 = scalar_lea.hbm %s0, %s164
          %s166 = sshll.u32 %s157, 4
          %s167 = int_to_ptr.vmem [resolvable:$true] %s166
          %172 = dma.hbm_to_vmem [thread:$0]  %s165, 256, %s167, %s154, 128, 128, 8
        $region24: #{tpu_custom_call.1} parent=19 // pred_fallthru
          _
      $region20: #{tpu_custom_call.1} parent=5 // pred_fallthru
        _
      %p173 = scmp.le.s32.totalorder 1, %s15
      %p174 = scmp.lt.s32.totalorder %s15, 3
      %p175 = pnand %p173, %p174
      %p176 = pneg %p175
      // Predicated region
      $region25: #{tpu_custom_call.1} parent=5 // pred_check
        _
      $region26: #{tpu_custom_call.1} parent=5 // pred_check_branch
        %178 = sbr.rel (%p175) target = $region28
      $region27: #{tpu_custom_call.1} parent=5 // pred_region
        %s179 = ssub.s32 %s15, 1
        %s180 = sand.u32 %s42, 1
        %s181 = scalar_lea.sflag [#allocation3], %s180
        %s182 = sand.u32 %s42, 1
        %s183 = smul.addr %s182, 16
        %s184 = scalar_lea.vmem [#allocation2], %s183
        // Predicated region
        $region29: #{tpu_custom_call.1} parent=27 // pred_check
          %p185 = pneg %p55
        $region30: #{tpu_custom_call.1} parent=27 // pred_check_branch
          %187 = sbr.rel (%p185) target = $region32
        $region31: #{tpu_custom_call.1} parent=27 // pred_region
          %188 = dma.done %s181, 256
        $region32: #{tpu_custom_call.1} parent=27 // pred_fallthru
          _
        // Predicated region
        $region33: #{tpu_custom_call.1} parent=27 // pred_check
          %p189 = pneg %p81
        $region34: #{tpu_custom_call.1} parent=27 // pred_check_branch
          %191 = sbr.rel (%p189) target = $region36
        $region35: #{tpu_custom_call.1} parent=27 // pred_region
          %192 = dma.done [#allocation6], 256
        $region36: #{tpu_custom_call.1} parent=27 // pred_fallthru
          _
        %s193 = sand.u32 %s42, 1
        %s194 = scalar_lea.sflag [#allocation3], %s193
        %s195 = sand.u32 %s42, 1
        %s196 = smul.addr %s195, 16
        %s197 = scalar_lea.vmem [#allocation2], %s196
        %p198 = pneg %p55
        %p199 = pneg %p52
        %p200 = pneg %p81
        %p201 = pneg %p78
        %p202 = pneg %p109
        %p203 = pneg %p106
        %s204 = sand.u32 %s96, 1
        %s205 = scalar_lea.sflag [#allocation4], %s204
        %s206 = sand.u32 %s96, 1
        %s207 = smul.addr %s206, 16
        %s208 = scalar_lea.vmem [#allocation7], %s207
        %s209 = smul.u32 2, %s24
        %s210 = smul.u32 2, %s24
        %s211 = ssub.s32 13, %s210
        %p212 = scmp.lt.s32.totalorder %s211, 2
        %s213 = scalar_select %p212, %s211, 2
        %s214 = smul.u32 128, %s213
        %s215 = smul.u32 2, %s24
        %v216 = vld [vmem:[%s184] sm:$0xff]
        %v217 = vld [vmem:[%s184 + $0x8] sm:$0xff]
        %v218 = vld [vmem:[#allocation5] sm:$0xff]
        %v219 = vld [vmem:[#allocation5 + $0x8] sm:$0xff]
        %v220 = vadd.f32 %v216, %v218
        %v221 = vadd.f32 %v217, %v219
        %222 = vst [vmem:[%s208] sm:$0xff] %v220
        %223 = vst [vmem:[%s208 + $0x8] sm:$0xff] %v221
        %s224 = sand.u32 %s96, 1
        %s225 = scalar_lea.sflag [#allocation4], %s224
        %s226 = sand.u32 %s96, 1
        %s227 = smul.addr %s226, 16
        %s228 = scalar_lea.vmem [#allocation7], %s227
        // Predicated region
        $region37: #{tpu_custom_call.1} parent=27 // pred_check
          %p229 = pneg %p106
        $region38: #{tpu_custom_call.1} parent=27 // pred_check_branch
          %231 = sbr.rel (%p229) target = $region40
        $region39: #{tpu_custom_call.1} parent=27 // pred_region
          %s232 = smul.u32 2, %s24
          %s234 = ssub.s32 256, 256
          %235 = vsyncadd %s225, %s234
          %s236 = smul.addr %s25, 2
          %s237 = sadd.s32 %s232, %s236
          %s238 = smul.addr %s237, 128
          %s239 = scalar_lea.hbm %s2, %s238
          %s240 = sshll.u32 %s228, 4
          %s241 = int_to_ptr.vmem [resolvable:$true] %s240
          %246 = dma.vmem_to_hbm [thread:$0]  %s241, 256, %s239, %s225, 128, 128, 8
        $region40: #{tpu_custom_call.1} parent=27 // pred_fallthru
          _
      $region28: #{tpu_custom_call.1} parent=5 // pred_fallthru
        _
      %p247 = scmp.le.s32.totalorder 2, %s15
      // Predicated region
      $region41: #{tpu_custom_call.1} parent=5 // pred_check
        %p248 = pneg %p247
      $region42: #{tpu_custom_call.1} parent=5 // pred_check_branch
        %250 = sbr.rel (%p248) target = $region44
      $region43: #{tpu_custom_call.1} parent=5 // pred_region
        %s251 = ssub.s32 %s15, 2
        // Predicated region
        $region45: #{tpu_custom_call.1} parent=43 // pred_check
          %p252 = pneg %p112
        $region46: #{tpu_custom_call.1} parent=43 // pred_check_branch
          %254 = sbr.rel (%p252) target = $region48
        $region47: #{tpu_custom_call.1} parent=43 // pred_region
          %s255 = sand.u32 %s97, 1
          %s256 = scalar_lea.sflag [#allocation4], %s255
          %s257 = sand.u32 %s97, 1
          %s258 = smul.addr %s257, 16
          %s259 = scalar_lea.vmem [#allocation7], %s258
          %260 = dma.done %s256, 256
        $region48: #{tpu_custom_call.1} parent=43 // pred_fallthru
          _
      $region44: #{tpu_custom_call.1} parent=5 // pred_fallthru
        _
    $region6: #{tpu_custom_call.1} parent=1 // loop_footer
      %s19 = sadd.s32 1, %s15
    $region7: #{tpu_custom_call.1} parent=1 // loop_footer_branch
      %14 = sbr.rel target = $region3
    $region8: #{tpu_custom_call.1} parent=1 // loop_exit
      _
    %261 = vsyncpa [#allocation3], 1
    %s262 = scalar_lea.sflag [#allocation3], 1
    %263 = vsyncpa %s262, 1
    %264 = vsyncpa [#allocation6], 1
    %265 = vsyncpa [#allocation4], 1
    %s266 = scalar_lea.sflag [#allocation4], 1
    %267 = vsyncpa %s266, 1

</llo_original>
